<compile_context>
chip_gen: v7x
topology: tpu7x:2x2x1
jax: 0.10.0
libtpu: 0.0.40
codegen_flags: <defaults>
</compile_context>

<pallas_src>
import jax
import jax.numpy as jnp
from jax.experimental import pallas as pl
from jax.experimental.pallas import tpu as pltpu

NUM_MODS = 10       # 10 SubModules in the ModuleList
WDIM = 2            # each SubModule.weight has shape (2,)
LANES = 128         # TPU lane width
SUBLANES = 8        # f32 sublane tile

# (4096, 128) f32 tile = 2 MiB per buffer.  Double-buffered input + output
# => ~8 MiB VMEM, fitting every generation's DEFAULT scoped-VMEM budget
# (v5e 16 MiB, v6e/v7x 32 MiB) with headroom, while keeping the per-step DMA
# time >> the ~0.35 us fixed grid-step overhead even at v7x's ~3.2 TB/s HBM.
ROW_BLOCK = 4096

# Below ~512 KiB the XLA-fused `v + wsum` is already at HBM roofline; the
# Pallas kernel only breaks even for large inputs on the zero-copy path.
_TINY_THRESHOLD = 1 << 17   # elements


def _round_up(x, m):
    return (x + m - 1) // m * m


def _add_wsum_kernel(w_ref, x_ref, o_ref):
    # w_ref: (1, 128) pre-summed, lane-tiled weight row.  Constant index_map
    #        keeps it resident in VMEM for the whole grid (no per-step DMA);
    #        the size-1 sublane dim is held in a replicated layout, so the
    #        broadcast add is one unmasked vadd + vst per (8, 128) vreg.
    # x_ref / o_ref: (tile_rows, 128) lane-dense tiles of the flattened input.
    o_ref[...] = x_ref[...] + w_ref[...]


def my_module1_forward(v, weights):
    """v: (..., 2) float; weights: (NUM_MODS, 2). Returns v + sum_i weights[i]."""
    assert v.shape[-1] == WDIM, "last dim must match the SubModule weight shape (2,)"
    assert weights.shape == (NUM_MODS, WDIM)
    orig_shape = v.shape
    n = v.size

    # Hoist the ModuleList loop: ten sequential broadcast-adds == one add of the
    # pre-summed weight.  (Summing first in f32 is not bit-identical to ten
    # sequential low-precision adds, but is at least as accurate.)
    wsum = jnp.sum(weights, axis=0).astype(v.dtype)           # (2,)

    # Kernel path only when it is strictly a win:
    #   * big enough that launch overhead is negligible,
    #   * n % 128 == 0 so (..., 2) -> (r, 128) is a free contiguous reshape
    #     (no pad / no output slice => single-pass HBM traffic),
    #   * f32 (sub-32-bit dtypes would need 16/32-row packed-sublane tiles).
    # Everything else uses the already-roofline fused XLA broadcast add.
    if (n < _TINY_THRESHOLD) or (n % LANES != 0) or (v.dtype != jnp.float32):
        return v + wsum

    r = n // LANES                                            # lane-rows (exact)

    # Tile rows.  Pallas handles the partial trailing block (padded read,
    # masked write), so only 8-row alignment of the tile matters — never round
    # r itself up.  For mid-size inputs split into >= 2 grid steps so the
    # "parallel" axis actually shards across v7x's two TensorCores.
    tr = min(ROW_BLOCK, _round_up(pl.cdiv(r, 2), SUBLANES))
    grid = (pl.cdiv(r, tr),)

    x2d = v.reshape(r, LANES)                                 # contiguous view, no copy

    # Lane-dense weight pattern [w0, w1, w0, w1, ...] of width 128.
    wrow = jnp.tile(wsum, LANES // WDIM).reshape(1, LANES)    # (1, 128)

    out2d = pl.pallas_call(
        _add_wsum_kernel,
        out_shape=jax.ShapeDtypeStruct((r, LANES), v.dtype),
        grid_spec=pltpu.PrefetchScalarGridSpec(
            num_scalar_prefetch=0,
            grid=grid,
            in_specs=[
                # weight row: constant index_map -> resident, no per-step DMA
                pl.BlockSpec((1, LANES), lambda i: (0, 0)),
                # streamed lane-dense input tiles
                pl.BlockSpec((tr, LANES), lambda i: (i, 0)),
            ],
            out_specs=pl.BlockSpec((tr, LANES), lambda i: (i, 0)),
        ),
        compiler_params=pltpu.CompilerParams(
            dimension_semantics=("parallel",)),
    )(wrow, x2d)

    return out2d.reshape(orig_shape)


if __name__ == "__main__":
    key = jax.random.PRNGKey(0)
    kw, kx1, kx2 = jax.random.split(key, 3)

    # Deterministic parameter init: 10 SubModule weights, each shape (2,)
    # (matches nn.Parameter(torch.randn(2)) per module, stacked).
    weights = jax.random.normal(kw, (NUM_MODS, WDIM), dtype=jnp.float32)
    wsum_ref = jnp.sum(weights, axis=0)

    # 1) Small input consistent with the module: exercises the fused-XLA path
    #    (kernel launch would only lose at this size).
    x_small = jax.random.normal(kx1, (8, WDIM), dtype=jnp.float32)
    out_small = jax.block_until_ready(my_module1_forward(x_small, weights))
    assert out_small.shape == x_small.shape
    assert jnp.allclose(out_small, x_small + wsum_ref, atol=1e-6), "small-path mismatch"

    # 2) Input that exercises the Pallas kernel path:
    #    66112 rows * 2 = 132224 elements (>= threshold, divisible by 128);
    #    r = 1033 lane-rows -> 2 "parallel" grid steps with a partial trailing
    #    block (padded read / masked write), zero-copy reshape both ways.
    rows = 66112
    x_big = jax.random.normal(kx2, (rows, WDIM), dtype=jnp.float32)
    out_big = jax.block_until_ready(my_module1_forward(x_big, weights))
    assert out_big.shape == x_big.shape
    assert jnp.allclose(out_big, x_big + wsum_ref, atol=1e-6), "kernel-path mismatch"

    print("KERNEL_OK")
</pallas_src>

<mosaic_0001>
module attributes {stable_mosaic.version = 11 : i64} {
  func.func @_add_wsum_kernel(%arg0: i32, %arg1: memref<1x128xf32, #tpu.memory_space<vmem>>, %arg2: memref<520x128xf32, #tpu.memory_space<vmem>>, %arg3: memref<520x128xf32, #tpu.memory_space<vmem>>) attributes {dimension_semantics = [#tpu.dimension_semantics<parallel>], iteration_bounds = array<i64: 2>, scalar_prefetch = 0 : i64, scratch_operands = 0 : i64, tpu.core_type = #tpu.core_type<tc>, window_params = [{pipeline_mode = #tpu.pipeline_mode<synchronous>, transform_indices = @transform_0, window_bounds = array<i64: 1, 128>}, {transform_indices = @transform_1, window_bounds = array<i64: 520, 128>}, {transform_indices = @transform_2, window_bounds = array<i64: 520, 128>}]} {
    %c0 = arith.constant 0 : index
    %c0_0 = arith.constant 0 : index
    %0 = vector.load %arg2[%c0, %c0_0] : memref<520x128xf32, #tpu.memory_space<vmem>>, vector<520x128xf32>
    %c0_1 = arith.constant 0 : index
    %c0_2 = arith.constant 0 : index
    %1 = vector.load %arg1[%c0_1, %c0_2] : memref<1x128xf32, #tpu.memory_space<vmem>>, vector<1x128xf32>
    %2 = vector.broadcast %1 : vector<1x128xf32> to vector<520x128xf32>
    %3 = arith.addf %0, %2 : vector<520x128xf32>
    %c0_3 = arith.constant 0 : index
    %c0_4 = arith.constant 0 : index
    %4 = vector.load %arg3[%c0_3, %c0_4] : memref<520x128xf32, #tpu.memory_space<vmem>>, vector<520x128xf32>
    tpu.vector_store %arg3[%c0_3, %c0_4], %3 {strides = array<i32>} : memref<520x128xf32, #tpu.memory_space<vmem>>, vector<520x128xf32>,
    return
  }
  func.func @transform_0(%arg0: i32) -> (i32, i32) {
    %c0_i32 = arith.constant 0 : i32
    %c0_i32_0 = arith.constant 0 : i32
    %c0_i32_1 = arith.constant 0 : i32
    return %c0_i32, %c0_i32_0 : i32, i32
  }
  func.func @transform_1(%arg0: i32) -> (i32, i32) {
    %c0_i32 = arith.constant 0 : i32
    %c0_i32_0 = arith.constant 0 : i32
    return %arg0, %c0_i32 : i32, i32
  }
  func.func @transform_2(%arg0: i32) -> (i32, i32) {
    %c0_i32 = arith.constant 0 : i32
    %c0_i32_0 = arith.constant 0 : i32
    return %arg0, %c0_i32 : i32, i32
  }
}

</mosaic_0001>

<llo_original>
// kernel: tpu_custom_call.1
$region0: #{tpu_custom_call.1}
  #allocation0 [shape = 'u32[]', space=smem, size = 0x4, offset = 0x4, fixed_abs, tag = 'smem constant byte address 0x4 - core index']
  #allocation1 [shape = 'u32[144,128]{1,0:T(1,128)}', space=vmem, size = 0x12000, scoped, tag = 'internal scratch']
  %s0 = inlined_call_operand.hbm [shape: f32[1,128], index: 0, kind: input, shape index: {}]
  %s1 = inlined_call_operand.hbm [shape: f32[1033,128], index: 1, kind: input, shape index: {}]
  %s2 = inlined_call_operand.hbm [shape: f32[1033,128], index: 2, kind: output, shape index: {}]
  %s3 = sld [smem:[#allocation0]]
  $region49: #{tpu_custom_call.1} parent=0
    _
  %s5 = ssub.s32 1, %s3
  %s6 = scalar_select 0, %s5, %s3
  $region1: #{tpu_custom_call.1} parent=0
    #allocation2 [shape = 'u8[512]{0}', space=vmem, size = 0x400, scoped, tag = 'input window, operand 0, single buffered']
    #allocation3 [shape = 's32[2]{0}', space=sflag, size = 0x8, scoped, tag = 'scoped memory for tpu_custom_call.1']
    #allocation4 [shape = 's32[2]{0}', space=sflag, size = 0x8, scoped, tag = 'scoped memory for tpu_custom_call.1']
    #allocation5 [shape = 'u8[532480]{0}', space=vmem, size = 0x82000, scoped, tag = 'input window, operand 1']
    #allocation6 [shape = 's32[2]{0}', space=sflag, size = 0x8, scoped, tag = 'scoped memory for tpu_custom_call.1']
    #allocation7 [shape = 'u8[532480]{0}', space=vmem, size = 0x82000, scoped, tag = 'output window, operand 0']
    %7 = vsyncpa [#allocation3], 0
    %8 = vsyncpa [#allocation6], 0
    %s9 = scalar_lea.sflag [#allocation6], 1
    %10 = vsyncpa %s9, 0
    %11 = vsyncpa [#allocation4], 0
    %s12 = scalar_lea.sflag [#allocation4], 1
    %13 = vsyncpa %s12, 0
    loop: start=0, step=1, limit=4
    $region2: #{tpu_custom_call.1} parent=1 // loop_pre_header
      _
    $region3: #{tpu_custom_call.1} parent=1 // loop_header
      %s15 = sphi 0, %s19
      %p16 = scmp.ge.s32.totalorder %s15, 4
      %s23 = sphi 0, %s23
      %s25 = sphi 0, %s23
      %s26 = sphi 0, %s25
      %s40 = sphi 0, %s26
      %s46 = sphi 0, %s48
      %s49 = sphi 0, %s46
      %s50 = sphi 0, %s49
      %s66 = sphi 0, %s50
      %s72 = sphi 0, %s74
      %s75 = sphi 0, %s72
      %s76 = sphi 0, %s75
      %s92 = sphi 0, %s76
    $region4: #{tpu_custom_call.1} parent=1 // loop_header_branch
      %18 = sbr.rel (%p16) target = $region8
    $region5: #{tpu_custom_call.1} parent=1 // loop_body
      %s20 = ssub.s32 %s15, 1
      %s21 = ssub.s32 %s15, 2
      %s22 = sadd.s32 %s15, 1
      %s24 = sadd.s32 %s23, 1
      %p27 = scmp.eq.s32.totalorder %s15, 1
      %p28 = scmp.ne.s32.totalorder %s23, %s25
      %p29 = scmp.eq.s32.totalorder %s15, 0
      %p30 = por %p28, %p29
      %p31 = scmp.ne.s32.totalorder %s23, %s25
      %p32 = scmp.eq.s32.totalorder %s20, 1
      %p33 = por %p31, %p32
      %p34 = scmp.ne.s32.totalorder %s25, %s26
      %p35 = scmp.eq.s32.totalorder %s20, 0
      %p36 = por %p34, %p35
      %p37 = scmp.ne.s32.totalorder %s25, %s26
      %p38 = scmp.eq.s32.totalorder %s21, 1
      %p39 = por %p37, %p38
      %p41 = scmp.ne.s32.totalorder %s26, %s40
      %p42 = scmp.eq.s32.totalorder %s21, 0
      %p43 = por %p41, %p42
      %s44 = ssub.s32 %s15, %s22
      %p45 = scmp.eq.s32.totalorder %s44, 0
      %s47 = sadd.s32 %s46, 1
      %s48 = scalar_select %p45, %s46, %s47
      %p51 = pneg %p45
      %p52 = scmp.eq.s32.totalorder %s15, 1
      %p53 = por %p51, %p52
      %p54 = scmp.ne.s32.totalorder %s46, %s49
      %p55 = scmp.eq.s32.totalorder %s15, 0
      %p56 = por %p54, %p55
      %p57 = scmp.ne.s32.totalorder %s46, %s49
      %p58 = scmp.eq.s32.totalorder %s20, 1
      %p59 = por %p57, %p58
      %p60 = scmp.ne.s32.totalorder %s49, %s50
      %p61 = scmp.eq.s32.totalorder %s20, 0
      %p62 = por %p60, %p61
      %p63 = scmp.ne.s32.totalorder %s49, %s50
      %p64 = scmp.eq.s32.totalorder %s21, 1
      %p65 = por %p63, %p64
      %p67 = scmp.ne.s32.totalorder %s50, %s66
      %p68 = scmp.eq.s32.totalorder %s21, 0
      %p69 = por %p67, %p68
      %s70 = ssub.s32 %s15, %s22
      %p71 = scmp.eq.s32.totalorder %s70, 0
      %s73 = sadd.s32 %s72, 1
      %s74 = scalar_select %p71, %s72, %s73
      %p77 = pneg %p71
      %p78 = scmp.eq.s32.totalorder %s15, 1
      %p79 = por %p77, %p78
      %p80 = scmp.ne.s32.totalorder %s72, %s75
      %p81 = scmp.eq.s32.totalorder %s15, 0
      %p82 = por %p80, %p81
      %p83 = scmp.ne.s32.totalorder %s72, %s75
      %p84 = scmp.eq.s32.totalorder %s20, 1
      %p85 = por %p83, %p84
      %p86 = scmp.ne.s32.totalorder %s75, %s76
      %p87 = scmp.eq.s32.totalorder %s20, 0
      %p88 = por %p86, %p87
      %p89 = scmp.ne.s32.totalorder %s75, %s76
      %p90 = scmp.eq.s32.totalorder %s21, 1
      %p91 = por %p89, %p90
      %p93 = scmp.ne.s32.totalorder %s76, %s92
      %p94 = scmp.eq.s32.totalorder %s21, 0
      %p95 = por %p93, %p94
      %p96 = scmp.le.s32.totalorder 1, %s15
      %p97 = scmp.lt.s32.totalorder %s15, 3
      %p98 = pnand %p96, %p97
      %p99 = pneg %p98
      // Predicated region
      $region9: #{tpu_custom_call.1} parent=5 // pred_check
        _
      $region10: #{tpu_custom_call.1} parent=5 // pred_check_branch
        %101 = sbr.rel (%p98) target = $region12
      $region11: #{tpu_custom_call.1} parent=5 // pred_region
        %s102 = ssub.s32 %s15, 1
        // Predicated region
        $region13: #{tpu_custom_call.1} parent=11 // pred_check
          %p103 = pneg %p36
        $region14: #{tpu_custom_call.1} parent=11 // pred_check_branch
          %105 = sbr.rel (%p103) target = $region16
        $region15: #{tpu_custom_call.1} parent=11 // pred_region
          %s107 = ssub.s32 16, 16
          %108 = vsyncadd [#allocation3], %s107
          %s110 = sshll.u32 [#allocation2], 4
          %s111 = int_to_ptr.vmem [resolvable:$true] %s110
          %113 = dma.hbm_to_vmem [thread:$0]  %s0, 16, %s111, [#allocation3]
        $region16: #{tpu_custom_call.1} parent=11 // pred_fallthru
          _
      $region12: #{tpu_custom_call.1} parent=5 // pred_fallthru
        _
      %p114 = scmp.lt.s32.totalorder %s15, 2
      // Predicated region
      $region17: #{tpu_custom_call.1} parent=5 // pred_check
        %p115 = pneg %p114
      $region18: #{tpu_custom_call.1} parent=5 // pred_check_branch
        %117 = sbr.rel (%p115) target = $region20
      $region19: #{tpu_custom_call.1} parent=5 // pred_region
        // Predicated region
        $region21: #{tpu_custom_call.1} parent=19 // pred_check
          %p118 = pneg %p56
        $region22: #{tpu_custom_call.1} parent=19 // pred_check_branch
          %120 = sbr.rel (%p118) target = $region24
        $region23: #{tpu_custom_call.1} parent=19 // pred_region
          %s121 = sand.u32 %s46, 1
          %s122 = scalar_lea.sflag [#allocation6], %s121
          %s123 = sand.u32 %s46, 1
          %s124 = smul.addr %s123, 520
          %s125 = scalar_lea.vmem [#allocation5], %s124
          %s126 = smul.u32 65, %s15
          %s128 = ssub.s32 8320, 8320
          %129 = vsyncadd %s122, %s128
          %s130 = smul.addr %s126, 128
          %s131 = scalar_lea.hbm %s1, %s130
          %s132 = sshll.u32 %s125, 4
          %s133 = int_to_ptr.vmem [resolvable:$true] %s132
          %138 = dma.hbm_to_vmem [thread:$0]  %s131, 8320, %s133, %s122, 128, 128, 8
        $region24: #{tpu_custom_call.1} parent=19 // pred_fallthru
          _
      $region20: #{tpu_custom_call.1} parent=5 // pred_fallthru
        _
      %p139 = scmp.le.s32.totalorder 1, %s15
      %p140 = scmp.lt.s32.totalorder %s15, 3
      %p141 = pnand %p139, %p140
      %p142 = pneg %p141
      // Predicated region
      $region25: #{tpu_custom_call.1} parent=5 // pred_check
        _
      $region26: #{tpu_custom_call.1} parent=5 // pred_check_branch
        %144 = sbr.rel (%p141) target = $region28
      $region27: #{tpu_custom_call.1} parent=5 // pred_region
        %s145 = ssub.s32 %s15, 1
        // Predicated region
        $region29: #{tpu_custom_call.1} parent=27 // pred_check
          %p146 = pneg %p36
        $region30: #{tpu_custom_call.1} parent=27 // pred_check_branch
          %148 = sbr.rel (%p146) target = $region32
        $region31: #{tpu_custom_call.1} parent=27 // pred_region
          %149 = dma.done [#allocation3], 16
        $region32: #{tpu_custom_call.1} parent=27 // pred_fallthru
          _
        %s150 = sand.u32 %s49, 1
        %s151 = scalar_lea.sflag [#allocation6], %s150
        %s152 = sand.u32 %s49, 1
        %s153 = smul.addr %s152, 520
        %s154 = scalar_lea.vmem [#allocation5], %s153
        // Predicated region
        $region33: #{tpu_custom_call.1} parent=27 // pred_check
          %p155 = pneg %p62
        $region34: #{tpu_custom_call.1} parent=27 // pred_check_branch
          %157 = sbr.rel (%p155) target = $region36
        $region35: #{tpu_custom_call.1} parent=27 // pred_region
          %158 = dma.done %s151, 8320
        $region36: #{tpu_custom_call.1} parent=27 // pred_fallthru
          _
        %p159 = pneg %p36
        %p160 = pneg %p33
        %s161 = sand.u32 %s49, 1
        %s162 = scalar_lea.sflag [#allocation6], %s161
        %s163 = sand.u32 %s49, 1
        %s164 = smul.addr %s163, 520
        %s165 = scalar_lea.vmem [#allocation5], %s164
        %p166 = pneg %p62
        %p167 = pneg %p59
        %p168 = pneg %p88
        %p169 = pneg %p85
        %s170 = sand.u32 %s75, 1
        %s171 = scalar_lea.sflag [#allocation4], %s170
        %s172 = sand.u32 %s75, 1
        %s173 = smul.addr %s172, 520
        %s174 = scalar_lea.vmem [#allocation7], %s173
        %s175 = smul.u32 65, %s20
        %s176 = smul.u32 65, %s20
        %v177 = vld [vmem:[%s154] sm:$0xff]
        %v178 = vld [vmem:[%s154 + $0x8] sm:$0xff]
        %v179 = vld [vmem:[%s154 + $0x10] sm:$0xff]
        %v180 = vld [vmem:[%s154 + $0x18] sm:$0xff]
        %v181 = vld [vmem:[%s154 + $0x20] sm:$0xff]
        %v182 = vld [vmem:[%s154 + $0x28] sm:$0xff]
        %v183 = vld [vmem:[%s154 + $0x30] sm:$0xff]
        %v184 = vld [vmem:[%s154 + $0x38] sm:$0xff]
        %v185 = vld [vmem:[%s154 + $0x40] sm:$0xff]
        %v186 = vld [vmem:[%s154 + $0x48] sm:$0xff]
        %v187 = vld [vmem:[%s154 + $0x50] sm:$0xff]
        %v188 = vld [vmem:[%s154 + $0x58] sm:$0xff]
        %v189 = vld [vmem:[%s154 + $0x60] sm:$0xff]
        %v190 = vld [vmem:[%s154 + $0x68] sm:$0xff]
        %v191 = vld [vmem:[%s154 + $0x70] sm:$0xff]
        %v192 = vld [vmem:[%s154 + $0x78] sm:$0xff]
        %v193 = vld [vmem:[%s154 + $0x80] sm:$0xff]
        %v194 = vld [vmem:[%s154 + $0x88] sm:$0xff]
        %v195 = vld [vmem:[%s154 + $0x90] sm:$0xff]
        %v196 = vld [vmem:[%s154 + $0x98] sm:$0xff]
        %v197 = vld [vmem:[%s154 + $0xa0] sm:$0xff]
        %v198 = vld [vmem:[%s154 + $0xa8] sm:$0xff]
        %v199 = vld [vmem:[%s154 + $0xb0] sm:$0xff]
        %v200 = vld [vmem:[%s154 + $0xb8] sm:$0xff]
        %v201 = vld [vmem:[%s154 + $0xc0] sm:$0xff]
        %v202 = vld [vmem:[%s154 + $0xc8] sm:$0xff]
        %v203 = vld [vmem:[%s154 + $0xd0] sm:$0xff]
        %v204 = vld [vmem:[%s154 + $0xd8] sm:$0xff]
        %v205 = vld [vmem:[%s154 + $0xe0] sm:$0xff]
        %v206 = vld [vmem:[%s154 + $0xe8] sm:$0xff]
        %v207 = vld [vmem:[%s154 + $0xf0] sm:$0xff]
        %v208 = vld [vmem:[%s154 + $0xf8] sm:$0xff]
        %v209 = vld [vmem:[%s154 + $0x100] sm:$0xff]
        %v210 = vld [vmem:[%s154 + $0x108] sm:$0xff]
        %v211 = vld [vmem:[%s154 + $0x110] sm:$0xff]
        %v212 = vld [vmem:[%s154 + $0x118] sm:$0xff]
        %v213 = vld [vmem:[%s154 + $0x120] sm:$0xff]
        %v214 = vld [vmem:[%s154 + $0x128] sm:$0xff]
        %v215 = vld [vmem:[%s154 + $0x130] sm:$0xff]
        %v216 = vld [vmem:[%s154 + $0x138] sm:$0xff]
        %v217 = vld [vmem:[%s154 + $0x140] sm:$0xff]
        %v218 = vld [vmem:[%s154 + $0x148] sm:$0xff]
        %v219 = vld [vmem:[%s154 + $0x150] sm:$0xff]
        %v220 = vld [vmem:[%s154 + $0x158] sm:$0xff]
        %v221 = vld [vmem:[%s154 + $0x160] sm:$0xff]
        %v222 = vld [vmem:[%s154 + $0x168] sm:$0xff]
        %v223 = vld [vmem:[%s154 + $0x170] sm:$0xff]
        %v224 = vld [vmem:[%s154 + $0x178] sm:$0xff]
        %v225 = vld [vmem:[%s154 + $0x180] sm:$0xff]
        %v226 = vld [vmem:[%s154 + $0x188] sm:$0xff]
        %v227 = vld [vmem:[%s154 + $0x190] sm:$0xff]
        %v228 = vld [vmem:[%s154 + $0x198] sm:$0xff]
        %v229 = vld [vmem:[%s154 + $0x1a0] sm:$0xff]
        %v230 = vld [vmem:[%s154 + $0x1a8] sm:$0xff]
        %v231 = vld [vmem:[%s154 + $0x1b0] sm:$0xff]
        %v232 = vld [vmem:[%s154 + $0x1b8] sm:$0xff]
        %v233 = vld [vmem:[%s154 + $0x1c0] sm:$0xff]
        %v234 = vld [vmem:[%s154 + $0x1c8] sm:$0xff]
        %v235 = vld [vmem:[%s154 + $0x1d0] sm:$0xff]
        %v236 = vld [vmem:[%s154 + $0x1d8] sm:$0xff]
        %v237 = vld [vmem:[%s154 + $0x1e0] sm:$0xff]
        %v238 = vld [vmem:[%s154 + $0x1e8] sm:$0xff]
        %v239 = vld [vmem:[%s154 + $0x1f0] sm:$0xff]
        %v240 = vld [vmem:[%s154 + $0x1f8] sm:$0xff]
        %v241 = vld [vmem:[%s154 + $0x200] sm:$0xff]
        %v242 = vld [vmem:[#allocation2] sm:$0x1]
        %v244 = vlaneseq
        %v245 = vshrl.u32 %v244, 7
        %v246 = vsub.s32 0, %v245
        %v247 = vrot.slane %v242, %v246
        %v249 = vadd.f32 %v177, %v247
        %v250 = vadd.f32 %v178, %v247
        %v251 = vadd.f32 %v179, %v247
        %v252 = vadd.f32 %v180, %v247
        %v253 = vadd.f32 %v181, %v247
        %v254 = vadd.f32 %v182, %v247
        %v255 = vadd.f32 %v183, %v247
        %v256 = vadd.f32 %v184, %v247
        %v257 = vadd.f32 %v185, %v247
        %v258 = vadd.f32 %v186, %v247
        %v259 = vadd.f32 %v187, %v247
        %v260 = vadd.f32 %v188, %v247
        %v261 = vadd.f32 %v189, %v247
        %v262 = vadd.f32 %v190, %v247
        %v263 = vadd.f32 %v191, %v247
        %v264 = vadd.f32 %v192, %v247
        %v265 = vadd.f32 %v193, %v247
        %v266 = vadd.f32 %v194, %v247
        %v267 = vadd.f32 %v195, %v247
        %v268 = vadd.f32 %v196, %v247
        %v269 = vadd.f32 %v197, %v247
        %v270 = vadd.f32 %v198, %v247
        %v271 = vadd.f32 %v199, %v247
        %v272 = vadd.f32 %v200, %v247
        %v273 = vadd.f32 %v201, %v247
        %v274 = vadd.f32 %v202, %v247
        %v275 = vadd.f32 %v203, %v247
        %v276 = vadd.f32 %v204, %v247
        %v277 = vadd.f32 %v205, %v247
        %v278 = vadd.f32 %v206, %v247
        %v279 = vadd.f32 %v207, %v247
        %v280 = vadd.f32 %v208, %v247
        %v281 = vadd.f32 %v209, %v247
        %v282 = vadd.f32 %v210, %v247
        %v283 = vadd.f32 %v211, %v247
        %v284 = vadd.f32 %v212, %v247
        %v285 = vadd.f32 %v213, %v247
        %v286 = vadd.f32 %v214, %v247
        %v287 = vadd.f32 %v215, %v247
        %v288 = vadd.f32 %v216, %v247
        %v289 = vadd.f32 %v217, %v247
        %v290 = vadd.f32 %v218, %v247
        %v291 = vadd.f32 %v219, %v247
        %v292 = vadd.f32 %v220, %v247
        %v293 = vadd.f32 %v221, %v247
        %v294 = vadd.f32 %v222, %v247
        %v295 = vadd.f32 %v223, %v247
        %v296 = vadd.f32 %v224, %v247
        %v297 = vadd.f32 %v225, %v247
        %v298 = vadd.f32 %v226, %v247
        %v299 = vadd.f32 %v227, %v247
        %v300 = vadd.f32 %v228, %v247
        %v301 = vadd.f32 %v229, %v247
        %v302 = vadd.f32 %v230, %v247
        %v303 = vadd.f32 %v231, %v247
        %v304 = vadd.f32 %v232, %v247
        %v305 = vadd.f32 %v233, %v247
        %v306 = vadd.f32 %v234, %v247
        %v307 = vadd.f32 %v235, %v247
        %v308 = vadd.f32 %v236, %v247
        %v309 = vadd.f32 %v237, %v247
        %v310 = vadd.f32 %v238, %v247
        %v311 = vadd.f32 %v239, %v247
        %v312 = vadd.f32 %v240, %v247
        %v313 = vadd.f32 %v241, %v247
        %314 = vst [vmem:[%s174] sm:$0xff] %v249
        %315 = vst [vmem:[%s174 + $0x8] sm:$0xff] %v250
        %316 = vst [vmem:[%s174 + $0x10] sm:$0xff] %v251
        %317 = vst [vmem:[%s174 + $0x18] sm:$0xff] %v252
        %318 = vst [vmem:[%s174 + $0x20] sm:$0xff] %v253
        %319 = vst [vmem:[%s174 + $0x28] sm:$0xff] %v254
        %320 = vst [vmem:[%s174 + $0x30] sm:$0xff] %v255
        %321 = vst [vmem:[%s174 + $0x38] sm:$0xff] %v256
        %322 = vst [vmem:[%s174 + $0x40] sm:$0xff] %v257
        %323 = vst [vmem:[%s174 + $0x48] sm:$0xff] %v258
        %324 = vst [vmem:[%s174 + $0x50] sm:$0xff] %v259
        %325 = vst [vmem:[%s174 + $0x58] sm:$0xff] %v260
        %326 = vst [vmem:[%s174 + $0x60] sm:$0xff] %v261
        %327 = vst [vmem:[%s174 + $0x68] sm:$0xff] %v262
        %328 = vst [vmem:[%s174 + $0x70] sm:$0xff] %v263
        %329 = vst [vmem:[%s174 + $0x78] sm:$0xff] %v264
        %330 = vst [vmem:[%s174 + $0x80] sm:$0xff] %v265
        %331 = vst [vmem:[%s174 + $0x88] sm:$0xff] %v266
        %332 = vst [vmem:[%s174 + $0x90] sm:$0xff] %v267
        %333 = vst [vmem:[%s174 + $0x98] sm:$0xff] %v268
        %334 = vst [vmem:[%s174 + $0xa0] sm:$0xff] %v269
        %335 = vst [vmem:[%s174 + $0xa8] sm:$0xff] %v270
        %336 = vst [vmem:[%s174 + $0xb0] sm:$0xff] %v271
        %337 = vst [vmem:[%s174 + $0xb8] sm:$0xff] %v272
        %338 = vst [vmem:[%s174 + $0xc0] sm:$0xff] %v273
        %339 = vst [vmem:[%s174 + $0xc8] sm:$0xff] %v274
        %340 = vst [vmem:[%s174 + $0xd0] sm:$0xff] %v275
        %341 = vst [vmem:[%s174 + $0xd8] sm:$0xff] %v276
        %342 = vst [vmem:[%s174 + $0xe0] sm:$0xff] %v277
        %343 = vst [vmem:[%s174 + $0xe8] sm:$0xff] %v278
        %344 = vst [vmem:[%s174 + $0xf0] sm:$0xff] %v279
        %345 = vst [vmem:[%s174 + $0xf8] sm:$0xff] %v280
        %346 = vst [vmem:[%s174 + $0x100] sm:$0xff] %v281
        %347 = vst [vmem:[%s174 + $0x108] sm:$0xff] %v282
        %348 = vst [vmem:[%s174 + $0x110] sm:$0xff] %v283
        %349 = vst [vmem:[%s174 + $0x118] sm:$0xff] %v284
        %350 = vst [vmem:[%s174 + $0x120] sm:$0xff] %v285
        %351 = vst [vmem:[%s174 + $0x128] sm:$0xff] %v286
        %352 = vst [vmem:[%s174 + $0x130] sm:$0xff] %v287
        %353 = vst [vmem:[%s174 + $0x138] sm:$0xff] %v288
        %354 = vst [vmem:[%s174 + $0x140] sm:$0xff] %v289
        %355 = vst [vmem:[%s174 + $0x148] sm:$0xff] %v290
        %356 = vst [vmem:[%s174 + $0x150] sm:$0xff] %v291
        %357 = vst [vmem:[%s174 + $0x158] sm:$0xff] %v292
        %358 = vst [vmem:[%s174 + $0x160] sm:$0xff] %v293
        %359 = vst [vmem:[%s174 + $0x168] sm:$0xff] %v294
        %360 = vst [vmem:[%s174 + $0x170] sm:$0xff] %v295
        %361 = vst [vmem:[%s174 + $0x178] sm:$0xff] %v296
        %362 = vst [vmem:[%s174 + $0x180] sm:$0xff] %v297
        %363 = vst [vmem:[%s174 + $0x188] sm:$0xff] %v298
        %364 = vst [vmem:[%s174 + $0x190] sm:$0xff] %v299
        %365 = vst [vmem:[%s174 + $0x198] sm:$0xff] %v300
        %366 = vst [vmem:[%s174 + $0x1a0] sm:$0xff] %v301
        %367 = vst [vmem:[%s174 + $0x1a8] sm:$0xff] %v302
        %368 = vst [vmem:[%s174 + $0x1b0] sm:$0xff] %v303
        %369 = vst [vmem:[%s174 + $0x1b8] sm:$0xff] %v304
        %370 = vst [vmem:[%s174 + $0x1c0] sm:$0xff] %v305
        %371 = vst [vmem:[%s174 + $0x1c8] sm:$0xff] %v306
        %372 = vst [vmem:[%s174 + $0x1d0] sm:$0xff] %v307
        %373 = vst [vmem:[%s174 + $0x1d8] sm:$0xff] %v308
        %374 = vst [vmem:[%s174 + $0x1e0] sm:$0xff] %v309
        %375 = vst [vmem:[%s174 + $0x1e8] sm:$0xff] %v310
        %376 = vst [vmem:[%s174 + $0x1f0] sm:$0xff] %v311
        %377 = vst [vmem:[%s174 + $0x1f8] sm:$0xff] %v312
        %378 = vst [vmem:[%s174 + $0x200] sm:$0xff] %v313
        %s379 = sand.u32 %s75, 1
        %s380 = scalar_lea.sflag [#allocation4], %s379
        %s381 = sand.u32 %s75, 1
        %s382 = smul.addr %s381, 520
        %s383 = scalar_lea.vmem [#allocation7], %s382
        // Predicated region
        $region37: #{tpu_custom_call.1} parent=27 // pred_check
          %p384 = pneg %p85
        $region38: #{tpu_custom_call.1} parent=27 // pred_check_branch
          %386 = sbr.rel (%p384) target = $region40
        $region39: #{tpu_custom_call.1} parent=27 // pred_region
          %s387 = smul.u32 65, %s20
          %s389 = ssub.s32 8320, 8320
          %390 = vsyncadd %s380, %s389
          %s391 = smul.addr %s387, 128
          %s392 = scalar_lea.hbm %s2, %s391
          %s393 = sshll.u32 %s383, 4
          %s394 = int_to_ptr.vmem [resolvable:$true] %s393
          %399 = dma.vmem_to_hbm [thread:$0]  %s394, 8320, %s392, %s380, 128, 128, 8
        $region40: #{tpu_custom_call.1} parent=27 // pred_fallthru
          _
      $region28: #{tpu_custom_call.1} parent=5 // pred_fallthru
        _
      %p400 = scmp.le.s32.totalorder 2, %s15
      // Predicated region
      $region41: #{tpu_custom_call.1} parent=5 // pred_check
        %p401 = pneg %p400
      $region42: #{tpu_custom_call.1} parent=5 // pred_check_branch
        %403 = sbr.rel (%p401) target = $region44
      $region43: #{tpu_custom_call.1} parent=5 // pred_region
        %s404 = ssub.s32 %s15, 2
        // Predicated region
        $region45: #{tpu_custom_call.1} parent=43 // pred_check
          %p405 = pneg %p91
        $region46: #{tpu_custom_call.1} parent=43 // pred_check_branch
          %407 = sbr.rel (%p405) target = $region48
        $region47: #{tpu_custom_call.1} parent=43 // pred_region
          %s408 = sand.u32 %s76, 1
          %s409 = scalar_lea.sflag [#allocation4], %s408
          %s410 = sand.u32 %s76, 1
          %s411 = smul.addr %s410, 520
          %s412 = scalar_lea.vmem [#allocation7], %s411
          %413 = dma.done %s409, 8320
        $region48: #{tpu_custom_call.1} parent=43 // pred_fallthru
          _
      $region44: #{tpu_custom_call.1} parent=5 // pred_fallthru
        _
    $region6: #{tpu_custom_call.1} parent=1 // loop_footer
      %s19 = sadd.s32 1, %s15
    $region7: #{tpu_custom_call.1} parent=1 // loop_footer_branch
      %14 = sbr.rel target = $region3
    $region8: #{tpu_custom_call.1} parent=1 // loop_exit
      _
    %414 = vsyncpa [#allocation3], 1
    %s415 = scalar_lea.sflag [#allocation3], 1
    %416 = vsyncpa %s415, 1
    %417 = vsyncpa [#allocation6], 1
    %s418 = scalar_lea.sflag [#allocation6], 1
    %419 = vsyncpa %s418, 1
    %420 = vsyncpa [#allocation4], 1
    %s421 = scalar_lea.sflag [#allocation4], 1
    %422 = vsyncpa %s421, 1

</llo_original>
